<compile_context>
chip_gen: v6e
topology: v6e:2x2x1
jax: 0.10.0
libtpu: 0.0.40
codegen_flags: <defaults>
</compile_context>

<pallas_src>
import jax
import jax.numpy as jnp
from jax.experimental import pallas as pl
from jax.experimental.pallas import tpu as pltpu

LANE = 128


def _round_up(n, m):
    return ((n + m - 1) // m) * m


def classifier_kernel(x_ref, w1_ref, b1_ref, w23_ref, b23_ref, out_ref):
    # encoder: Linear(D_in, H_pad) + ReLU   (bf16 operands, f32 MXU accumulate)
    h = jnp.dot(x_ref[...], w1_ref[...],
                preferred_element_type=jnp.float32) + b1_ref[...]
    h = jnp.maximum(h, 0.0).astype(jnp.bfloat16)
    # fused [encoder Linear(H, 20)] @ [head Linear(20, 10)] == Linear(H_pad, 10)
    out_ref[...] = (jnp.dot(h, w23_ref[...],
                            preferred_element_type=jnp.float32)
                    + b23_ref[...]).astype(out_ref.dtype)


def init_params(key, d_in, hidden, latent, n_classes):
    """PyTorch-style init U(-1/sqrt(fan_in), 1/sqrt(fan_in)).

    Weights stored as (in, out) — transpose of PyTorch's (out, in) — so the
    kernel computes y = x @ W + b directly.  Biases are (1, out).
    """
    ks = jax.random.split(key, 6)

    def lin(kw, kb, fan_in, fan_out):
        bound = 1.0 / jnp.sqrt(fan_in)
        w = jax.random.uniform(kw, (fan_in, fan_out), jnp.float32, -bound, bound)
        b = jax.random.uniform(kb, (1, fan_out), jnp.float32, -bound, bound)
        return w, b

    w1, b1 = lin(ks[0], ks[1], d_in, hidden)
    w2, b2 = lin(ks[2], ks[3], hidden, latent)
    w3, b3 = lin(ks[4], ks[5], latent, n_classes)
    return {"w1": w1, "b1": b1, "w2": w2, "b2": b2, "w3": w3, "b3": b3}


def prepare_params(p, *, lane=LANE):
    """Fuse the two trailing linears, pad hidden to one lane group, narrow to bf16."""
    w1, b1 = p["w1"], p["b1"]
    # z @ w3 + b3 where z = h @ w2 + b2  ->  h @ (w2 @ w3) + (b2 @ w3 + b3)
    w23 = p["w2"] @ p["w3"]
    b23 = p["b2"] @ p["w3"] + p["b3"]

    hidden = w1.shape[1]
    h_pad = _round_up(hidden, lane)
    if h_pad != hidden:
        pad = h_pad - hidden
        w1 = jnp.pad(w1, ((0, 0), (0, pad)))     # extra h columns -> 0
        b1 = jnp.pad(b1, ((0, 0), (0, pad)))     # ReLU(0) = 0
        w23 = jnp.pad(w23, ((0, pad), (0, 0)))   # zero rows -> no contribution

    # Stream weights as bf16; biases stay f32 (resident + tiny, better accuracy).
    return {"w1": w1.astype(jnp.bfloat16), "b1": b1.astype(jnp.float32),
            "w23": w23.astype(jnp.bfloat16), "b23": b23.astype(jnp.float32)}


def _pick_batch_tile(B, d_in):
    """Largest batch tile whose double-buffered x/out tiles fit a gen-safe
    VMEM budget.  x tile is lane-padded to 128 in VMEM, as is the 10-wide out."""
    budget = 24 << 20                       # <= half of the 48 MiB scoped limit
    d_lanes = _round_up(d_in, LANE)
    out_lanes = LANE
    per_row = 2 * (d_lanes * 2) + 2 * (out_lanes * 4)   # bf16 x + f32 out, x2 buffers
    tm_cap = (budget // per_row // 512) * 512
    tm_cap = max(512, min(8192, tm_cap))    # cap -> >=2 grid steps for big B (v7x 2 TCs)
    if B <= tm_cap:
        return B                            # single block == full batch dim (always legal)
    return tm_cap


@jax.jit
def classifier_forward(x, fused):
    """x: (B, D_in) float32.  fused: output of prepare_params().  Returns f32 logits."""
    B, d_in = x.shape
    h_pad = fused["w1"].shape[1]
    n_cls = fused["w23"].shape[1]

    x = x.astype(jnp.bfloat16)              # halve streamed input bytes (mem-bound)
    tm = _pick_batch_tile(B, d_in)
    grid = (pl.cdiv(B, tm),)                # ragged last block handled by Pallas

    flops = 2 * B * (d_in * h_pad + h_pad * n_cls)
    bytes_accessed = (B * d_in * 2 + B * n_cls * 4          # bf16 x in, f32 out
                      + d_in * h_pad * 2 + h_pad * 4        # bf16 w1, f32 b1
                      + h_pad * n_cls * 2 + n_cls * 4)      # bf16 w23, f32 b23

    return pl.pallas_call(
        classifier_kernel,
        out_shape=jax.ShapeDtypeStruct((B, n_cls), jnp.float32),
        grid=grid,
        in_specs=[
            pl.BlockSpec((tm, d_in), lambda i: (i, 0)),      # x: streamed per tile
            pl.BlockSpec((d_in, h_pad), lambda i: (0, 0)),   # w1: resident
            pl.BlockSpec((1, h_pad), lambda i: (0, 0)),      # b1: resident
            pl.BlockSpec((h_pad, n_cls), lambda i: (0, 0)),  # w23: resident
            pl.BlockSpec((1, n_cls), lambda i: (0, 0)),      # b23: resident
        ],
        out_specs=pl.BlockSpec((tm, n_cls), lambda i: (i, 0)),
        compiler_params=pltpu.CompilerParams(
            dimension_semantics=("parallel",),
            vmem_limit_bytes=48 << 20),
        cost_estimate=pl.CostEstimate(
            flops=flops, transcendentals=0, bytes_accessed=bytes_accessed),
    )(x, fused["w1"], fused["b1"], fused["w23"], fused["b23"])


def reference_forward_f32(x, p):
    """Unfused pure-f32 reference matching the original module semantics."""
    h = jnp.maximum(x @ p["w1"] + p["b1"], 0.0)
    z = h @ p["w2"] + p["b2"]          # encoder Linear(H, 20)
    return z @ p["w3"] + p["b3"]       # head Linear(20, 10)


def reference_forward_matched(x, fused):
    """Reference with the same bf16 operands / f32 accumulation as the kernel."""
    xb = x.astype(jnp.bfloat16)
    h = jnp.dot(xb, fused["w1"], preferred_element_type=jnp.float32) + fused["b1"]
    h = jnp.maximum(h, 0.0).astype(jnp.bfloat16)
    return jnp.dot(h, fused["w23"], preferred_element_type=jnp.float32) + fused["b23"]


if __name__ == "__main__":
    # Small shapes consistent with the module: flattened input, latent dim 20,
    # 10 output classes (nn.Linear(20, 10)).
    B, D_IN, HIDDEN, LATENT, N_CLASSES = 2, 64, 32, 20, 10

    key = jax.random.PRNGKey(0)
    kx, kp = jax.random.split(key)
    x = jax.random.normal(kx, (B, D_IN), dtype=jnp.float32)

    params = init_params(kp, D_IN, HIDDEN, LATENT, N_CLASSES)
    fused = prepare_params(params)

    out = jax.block_until_ready(classifier_forward(x, fused))
    assert out.shape == (B, N_CLASSES)

    # Tight check vs a reference with identical bf16/f32 numerics.
    matched = reference_forward_matched(x, fused)
    assert jnp.allclose(out, matched, atol=1e-3, rtol=1e-3)

    # Semantic check vs the unfused f32 module forward (loose: bf16 streaming).
    ref = reference_forward_f32(x, params)
    assert jnp.allclose(out, ref, atol=1e-1, rtol=1e-1)

    print("KERNEL_OK")
</pallas_src>

<mosaic_0001>
module attributes {stable_mosaic.version = 11 : i64} {
  func.func @classifier_kernel(%arg0: i32, %arg1: memref<2x64xbf16, #tpu.memory_space<vmem>>, %arg2: memref<64x128xbf16, #tpu.memory_space<vmem>>, %arg3: memref<1x128xf32, #tpu.memory_space<vmem>>, %arg4: memref<128x10xbf16, #tpu.memory_space<vmem>>, %arg5: memref<1x10xf32, #tpu.memory_space<vmem>>, %arg6: memref<2x10xf32, #tpu.memory_space<vmem>>) attributes {dimension_semantics = [#tpu.dimension_semantics<parallel>], iteration_bounds = array<i64: 1>, scalar_prefetch = 0 : i64, scratch_operands = 0 : i64, tpu.core_type = #tpu.core_type<tc>, window_params = [{transform_indices = @transform_0, window_bounds = array<i64: 2, 64>}, {pipeline_mode = #tpu.pipeline_mode<synchronous>, transform_indices = @transform_1, window_bounds = array<i64: 64, 128>}, {pipeline_mode = #tpu.pipeline_mode<synchronous>, transform_indices = @transform_2, window_bounds = array<i64: 1, 128>}, {pipeline_mode = #tpu.pipeline_mode<synchronous>, transform_indices = @transform_3, window_bounds = array<i64: 128, 10>}, {pipeline_mode = #tpu.pipeline_mode<synchronous>, transform_indices = @transform_4, window_bounds = array<i64: 1, 10>}, {transform_indices = @transform_5, window_bounds = array<i64: 2, 10>}]} {
    %c0 = arith.constant 0 : index
    %c0_0 = arith.constant 0 : index
    %0 = vector.load %arg1[%c0, %c0_0] : memref<2x64xbf16, #tpu.memory_space<vmem>>, vector<2x64xbf16>
    %c0_1 = arith.constant 0 : index
    %c0_2 = arith.constant 0 : index
    %1 = vector.load %arg2[%c0_1, %c0_2] : memref<64x128xbf16, #tpu.memory_space<vmem>>, vector<64x128xbf16>
    %cst = arith.constant dense<0.000000e+00> : vector<2x128xf32>
    %2 = tpu.matmul %0, %1, %cst {dimension_numbers = #tpu.dot_dimension_numbers<[1], [0], [0], [1], [0, 0, 1, 1], [], []>} : vector<2x64xbf16>, vector<64x128xbf16>, vector<2x128xf32> -> vector<2x128xf32>
    %c0_3 = arith.constant 0 : index
    %c0_4 = arith.constant 0 : index
    %3 = vector.load %arg3[%c0_3, %c0_4] : memref<1x128xf32, #tpu.memory_space<vmem>>, vector<1x128xf32>
    %4 = vector.broadcast %3 : vector<1x128xf32> to vector<2x128xf32>
    %5 = arith.addf %2, %4 : vector<2x128xf32>
    %cst_5 = arith.constant 0.000000e+00 : f32
    %6 = vector.broadcast %cst_5 : f32 to vector<2x128xf32>
    %7 = arith.maximumf %5, %6 : vector<2x128xf32>
    %8 = arith.truncf %7 : vector<2x128xf32> to vector<2x128xbf16>
    %c0_6 = arith.constant 0 : index
    %c0_7 = arith.constant 0 : index
    %9 = vector.load %arg4[%c0_6, %c0_7] : memref<128x10xbf16, #tpu.memory_space<vmem>>, vector<128x10xbf16>
    %cst_8 = arith.constant dense<0.000000e+00> : vector<2x10xf32>
    %10 = tpu.matmul %8, %9, %cst_8 {dimension_numbers = #tpu.dot_dimension_numbers<[1], [0], [0], [1], [0, 0, 1, 1], [], []>} : vector<2x128xbf16>, vector<128x10xbf16>, vector<2x10xf32> -> vector<2x10xf32>
    %c0_9 = arith.constant 0 : index
    %c0_10 = arith.constant 0 : index
    %11 = vector.load %arg5[%c0_9, %c0_10] : memref<1x10xf32, #tpu.memory_space<vmem>>, vector<1x10xf32>
    %12 = vector.broadcast %11 : vector<1x10xf32> to vector<2x10xf32>
    %13 = arith.addf %10, %12 : vector<2x10xf32>
    %c0_11 = arith.constant 0 : index
    %c0_12 = arith.constant 0 : index
    %14 = vector.load %arg6[%c0_11, %c0_12] : memref<2x10xf32, #tpu.memory_space<vmem>>, vector<2x10xf32>
    tpu.vector_store %arg6[%c0_11, %c0_12], %13 {strides = array<i32>} : memref<2x10xf32, #tpu.memory_space<vmem>>, vector<2x10xf32>,
    return
  }
  func.func @transform_0(%arg0: i32) -> (i32, i32) {
    %c0_i32 = arith.constant 0 : i32
    %c0_i32_0 = arith.constant 0 : i32
    return %arg0, %c0_i32 : i32, i32
  }
  func.func @transform_1(%arg0: i32) -> (i32, i32) {
    %c0_i32 = arith.constant 0 : i32
    %c0_i32_0 = arith.constant 0 : i32
    %c0_i32_1 = arith.constant 0 : i32
    return %c0_i32, %c0_i32_0 : i32, i32
  }
  func.func @transform_2(%arg0: i32) -> (i32, i32) {
    %c0_i32 = arith.constant 0 : i32
    %c0_i32_0 = arith.constant 0 : i32
    %c0_i32_1 = arith.constant 0 : i32
    return %c0_i32, %c0_i32_0 : i32, i32
  }
  func.func @transform_3(%arg0: i32) -> (i32, i32) {
    %c0_i32 = arith.constant 0 : i32
    %c0_i32_0 = arith.constant 0 : i32
    %c0_i32_1 = arith.constant 0 : i32
    return %c0_i32, %c0_i32_0 : i32, i32
  }
  func.func @transform_4(%arg0: i32) -> (i32, i32) {
    %c0_i32 = arith.constant 0 : i32
    %c0_i32_0 = arith.constant 0 : i32
    %c0_i32_1 = arith.constant 0 : i32
    return %c0_i32, %c0_i32_0 : i32, i32
  }
  func.func @transform_5(%arg0: i32) -> (i32, i32) {
    %c0_i32 = arith.constant 0 : i32
    %c0_i32_0 = arith.constant 0 : i32
    return %arg0, %c0_i32 : i32, i32
  }
}

</mosaic_0001>

<llo_original>
// kernel: classifier_forward.1
$region0: #{classifier_forward.1}
  #allocation0 [shape = 'u32[]', space=smem, size = 0x4, offset = 0x4, fixed_abs, tag = 'smem constant byte address 0x4 - core index']
  #allocation1 [shape = 'u32[144,128]{1,0:T(1,128)}', space=vmem, size = 0x12000, scoped, tag = 'internal scratch']
  %s0 = inlined_call_operand.vmem [shape: bf16[2,64], index: 0, kind: input, shape index: {}]
  %s1 = inlined_call_operand.vmem [shape: bf16[64,128], index: 1, kind: input, shape index: {}]
  %s2 = inlined_call_operand.vmem [shape: f32[1,128], index: 2, kind: input, shape index: {}]
  %s3 = inlined_call_operand.vmem [shape: bf16[128,10], index: 3, kind: input, shape index: {}]
  %s4 = inlined_call_operand.vmem [shape: f32[1,10], index: 4, kind: input, shape index: {}]
  %s5 = inlined_call_operand.hbm [shape: f32[2,10], index: 5, kind: output, shape index: {}]
  %s6 = sld [smem:[#allocation0]]
  $region30: #{classifier_forward.1} parent=0
    _
  %s8 = ssub.s32 1, %s6
  %s9 = scalar_select 0, %s8, %s6
  $region1: #{classifier_forward.1} parent=0
    #allocation2 [shape = 'u8[1024]{0}', space=vmem, size = 0x400, scoped, tag = 'output window, operand 0, single buffered']
    #allocation3 [shape = 's32[1]{0}', space=sflag, size = 0x4, scoped, tag = 'scoped memory for classifier_forward.1']
    %10 = vsyncpa [#allocation3], 0
    // Predicated region
    $region2: #{classifier_forward.1} parent=1 // pred_check
      _
    $region3: #{classifier_forward.1} parent=1 // pred_check_branch
      %12 = sbr.rel (0) target = $region5
    $region4: #{classifier_forward.1} parent=1 // pred_region
      _
    $region5: #{classifier_forward.1} parent=1 // pred_fallthru
      _
    // Predicated region
    $region6: #{classifier_forward.1} parent=1 // pred_check
      _
    $region7: #{classifier_forward.1} parent=1 // pred_check_branch
      %14 = sbr.rel (0) target = $region9
    $region8: #{classifier_forward.1} parent=1 // pred_region
      _
    $region9: #{classifier_forward.1} parent=1 // pred_fallthru
      _
    // Predicated region
    $region10: #{classifier_forward.1} parent=1 // pred_check
      _
    $region11: #{classifier_forward.1} parent=1 // pred_check_branch
      %16 = sbr.rel (0) target = $region13
    $region12: #{classifier_forward.1} parent=1 // pred_region
      _
    $region13: #{classifier_forward.1} parent=1 // pred_fallthru
      _
    // Predicated region
    $region14: #{classifier_forward.1} parent=1 // pred_check
      _
    $region15: #{classifier_forward.1} parent=1 // pred_check_branch
      %18 = sbr.rel (0) target = $region17
    $region16: #{classifier_forward.1} parent=1 // pred_region
      _
    $region17: #{classifier_forward.1} parent=1 // pred_fallthru
      _
    // Predicated region
    $region18: #{classifier_forward.1} parent=1 // pred_check
      _
    $region19: #{classifier_forward.1} parent=1 // pred_check_branch
      %20 = sbr.rel (0) target = $region21
    $region20: #{classifier_forward.1} parent=1 // pred_region
      _
    $region21: #{classifier_forward.1} parent=1 // pred_fallthru
      _
    %v22 = vld [vmem:[%s0] sm:$0x1]
    %v23 = vld [vmem:[%s1] sm:$0xf]
    %v24 = vld [vmem:[%s1 + $0x4] sm:$0xf]
    %v25 = vld [vmem:[%s1 + $0x8] sm:$0xf]
    %v26 = vld [vmem:[%s1 + $0xc] sm:$0xf]
    %v27 = vld [vmem:[%s1 + $0x10] sm:$0xf]
    %v28 = vld [vmem:[%s1 + $0x14] sm:$0xf]
    %v29 = vld [vmem:[%s1 + $0x18] sm:$0xf]
    %v30 = vld [vmem:[%s1 + $0x1c] sm:$0xf]
    %v31 = vld [vmem:[%s2] sm:$0x1]
    %v33 = vlaneseq
    %v34 = vshrl.u32 %v33, 7
    %v35 = vsub.s32 0, %v34
    %v36 = vrot.slane %v31, %v35
    %v46 = vunpack.c.l.b16 %v23
    %v47 = vunpack.c.l.b16 %v24
    %v48 = vunpack.c.l.b16 %v25
    %v49 = vunpack.c.l.b16 %v26
    %v50 = vunpack.c.l.b16 %v27
    %v51 = vunpack.c.l.b16 %v28
    %v52 = vunpack.c.l.b16 %v29
    %v53 = vunpack.c.l.b16 %v30
    %v54 = vpack.c.b16 %v47, %v46
    %v55 = vpack.c.b16 %v49, %v48
    %v56 = vpack.c.b16 %v51, %v50
    %v57 = vpack.c.b16 %v53, %v52
    %vm62 = vcmask 523264
    %v64 = vsel %vm62, %v22, 0
    %66 = vmatprep.subr.bf16.mxu0 0
    %67 = vmatpush1.bf16.msra.mxu0 0
    %68 = vmatprep.subr.bf16.mxu0 0
    %69 = vmatpush1.bf16.msra.mxu0 0
    %70 = vmatprep.subr.bf16.mxu0 0
    %71 = vmatpush1.bf16.msra.mxu0 0
    %72 = vmatprep.subr.bf16.mxu0 0
    %73 = vmatpush1.bf16.msra.mxu0 0
    %74 = vmatprep.subr.bf16.mxu0 0
    %75 = vmatpush1.bf16.msra.mxu0 %v57
    %76 = vmatprep.subr.bf16.mxu0 0
    %77 = vmatpush1.bf16.msra.mxu0 %v56
    %78 = vmatprep.subr.bf16.mxu0 0
    %79 = vmatpush1.bf16.msra.mxu0 %v55
    %80 = vmatprep.subr.bf16.mxu0 0
    %81 = vmatpush1.bf16.msra.mxu0 %v54
    %82 = vmatprep.subr.bf16.mxu0 0
    %83 = vmatpush2.bf16.msra.mxu0 0
    %84 = vmatprep.subr.bf16.mxu0 0
    %85 = vmatpush2.bf16.msra.mxu0 0
    %86 = vmatprep.subr.bf16.mxu0 0
    %87 = vmatpush2.bf16.msra.mxu0 0
    %88 = vmatprep.subr.bf16.mxu0 0
    %89 = vmatpush2.bf16.msra.mxu0 0
    %90 = vmatprep.subr.bf16.mxu0 0
    %91 = vmatpush2.bf16.msra.mxu0 0
    %92 = vmatprep.subr.bf16.mxu0 0
    %93 = vmatpush2.bf16.msra.mxu0 0
    %94 = vmatprep.subr.bf16.mxu0 0
    %95 = vmatpush2.bf16.msra.mxu0 0
    %96 = vmatprep.subr.bf16.mxu0 0
    %97 = vmatpush2.bf16.msra.mxu0 0
    %98 = vmatprep.mubr.bf16.mxu0 0
    %99 = vmatmul.mubr.bf16.gmra.mxu0 %v64
    %v100 = vpop.f32.mrf.mxu0
    %v101 = vadd.f32 %v36, %v100
    %v102 = vpop.f32.mrf.mxu0
    %v103 = vpop.f32.mrf.mxu0
    %v104 = vpop.f32.mrf.mxu0
    %105 = vdwg.mxu0
    %v106 = vmax.f32 %v101, 0.0
    %v107 = vpack.c.bf16 %v106, %v106
    %v108 = vld [vmem:[%s3] sm:$0xf]
    %v109 = vld [vmem:[%s3 + $0x4] sm:$0xf]
    %v110 = vld [vmem:[%s3 + $0x8] sm:$0xf]
    %v111 = vld [vmem:[%s3 + $0xc] sm:$0xf]
    %v112 = vld [vmem:[%s3 + $0x10] sm:$0xf]
    %v113 = vld [vmem:[%s3 + $0x14] sm:$0xf]
    %v114 = vld [vmem:[%s3 + $0x18] sm:$0xf]
    %v115 = vld [vmem:[%s3 + $0x1c] sm:$0xf]
    %v116 = vld [vmem:[%s3 + $0x20] sm:$0xf]
    %v117 = vld [vmem:[%s3 + $0x24] sm:$0xf]
    %v118 = vld [vmem:[%s3 + $0x28] sm:$0xf]
    %v119 = vld [vmem:[%s3 + $0x2c] sm:$0xf]
    %v120 = vld [vmem:[%s3 + $0x30] sm:$0xf]
    %v121 = vld [vmem:[%s3 + $0x34] sm:$0xf]
    %v122 = vld [vmem:[%s3 + $0x38] sm:$0xf]
    %v123 = vld [vmem:[%s3 + $0x3c] sm:$0xf]
    %v124 = vld [vmem:[%s4] sm:$0x1]
    %v126 = vlaneseq
    %v127 = vshrl.u32 %v126, 7
    %v128 = vsub.s32 0, %v127
    %v129 = vrot.slane %v124, %v128
    %v147 = vunpack.c.l.b16 %v108
    %v148 = vunpack.c.l.b16 %v109
    %v149 = vunpack.c.l.b16 %v110
    %v150 = vunpack.c.l.b16 %v111
    %v151 = vunpack.c.l.b16 %v112
    %v152 = vunpack.c.l.b16 %v113
    %v153 = vunpack.c.l.b16 %v114
    %v154 = vunpack.c.l.b16 %v115
    %v155 = vunpack.c.l.b16 %v116
    %v156 = vunpack.c.l.b16 %v117
    %v157 = vunpack.c.l.b16 %v118
    %v158 = vunpack.c.l.b16 %v119
    %v159 = vunpack.c.l.b16 %v120
    %v160 = vunpack.c.l.b16 %v121
    %v161 = vunpack.c.l.b16 %v122
    %v162 = vunpack.c.l.b16 %v123
    %v163 = vpack.c.b16 %v148, %v147
    %v164 = vpack.c.b16 %v150, %v149
    %v165 = vpack.c.b16 %v152, %v151
    %v166 = vpack.c.b16 %v154, %v153
    %v167 = vpack.c.b16 %v156, %v155
    %v168 = vpack.c.b16 %v158, %v157
    %v169 = vpack.c.b16 %v160, %v159
    %v170 = vpack.c.b16 %v162, %v161
    %179 = vmatprep.subr.bf16.mxu0 0
    %180 = vmatpush1.bf16.msra.mxu0 %v170
    %181 = vmatprep.subr.bf16.mxu0 0
    %182 = vmatpush1.bf16.msra.mxu0 %v169
    %183 = vmatprep.subr.bf16.mxu0 0
    %184 = vmatpush1.bf16.msra.mxu0 %v168
    %185 = vmatprep.subr.bf16.mxu0 0
    %186 = vmatpush1.bf16.msra.mxu0 %v167
    %187 = vmatprep.subr.bf16.mxu0 0
    %188 = vmatpush1.bf16.msra.mxu0 %v166
    %189 = vmatprep.subr.bf16.mxu0 0
    %190 = vmatpush1.bf16.msra.mxu0 %v165
    %191 = vmatprep.subr.bf16.mxu0 0
    %192 = vmatpush1.bf16.msra.mxu0 %v164
    %193 = vmatprep.subr.bf16.mxu0 0
    %194 = vmatpush1.bf16.msra.mxu0 %v163
    %195 = vmatprep.subr.bf16.mxu0 0
    %196 = vmatpush2.bf16.msra.mxu0 0
    %197 = vmatprep.subr.bf16.mxu0 0
    %198 = vmatpush2.bf16.msra.mxu0 0
    %199 = vmatprep.subr.bf16.mxu0 0
    %200 = vmatpush2.bf16.msra.mxu0 0
    %201 = vmatprep.subr.bf16.mxu0 0
    %202 = vmatpush2.bf16.msra.mxu0 0
    %203 = vmatprep.subr.bf16.mxu0 0
    %204 = vmatpush2.bf16.msra.mxu0 0
    %205 = vmatprep.subr.bf16.mxu0 0
    %206 = vmatpush2.bf16.msra.mxu0 0
    %207 = vmatprep.subr.bf16.mxu0 0
    %208 = vmatpush2.bf16.msra.mxu0 0
    %209 = vmatprep.subr.bf16.mxu0 0
    %210 = vmatpush2.bf16.msra.mxu0 0
    %211 = vmatprep.mubr.bf16.mxu0 0
    %212 = vmatmul.mubr.bf16.gmra.mxu0 %v107
    %v213 = vpop.f32.mrf.mxu0
    %v214 = vadd.f32 %v129, %v213
    %v215 = vpop.f32.mrf.mxu0
    %v216 = vpop.f32.mrf.mxu0
    %v217 = vpop.f32.mrf.mxu0
    %218 = vdwg.mxu0
    %vm219 = vcmask 74752
    %220 = vst.msk [vmem:[#allocation2] sm:$0x3] %vm219, %v214
    // Predicated region
    $region22: #{classifier_forward.1} parent=1 // pred_check
      _
    $region23: #{classifier_forward.1} parent=1 // pred_check_branch
      %222 = sbr.rel (0) target = $region25
    $region24: #{classifier_forward.1} parent=1 // pred_region
      %s224 = ssub.s32 32, 32
      %225 = vsyncadd [#allocation3], %s224
      %s227 = sshll.u32 [#allocation2], 4
      %s228 = int_to_ptr.vmem [resolvable:$true] %s227
      %230 = dma.vmem_to_hbm [thread:$0]  %s228, 32, %s5, [#allocation3]
    $region25: #{classifier_forward.1} parent=1 // pred_fallthru
      _
    // Predicated region
    $region26: #{classifier_forward.1} parent=1 // pred_check
      _
    $region27: #{classifier_forward.1} parent=1 // pred_check_branch
      %232 = sbr.rel (0) target = $region29
    $region28: #{classifier_forward.1} parent=1 // pred_region
      %233 = dma.done [#allocation3], 32
    $region29: #{classifier_forward.1} parent=1 // pred_fallthru
      _
    %234 = vsyncpa [#allocation3], 1

</llo_original>
